<compile_context>
chip_gen: v5e
topology: v5e:2x2
jax: 0.10.0
libtpu: 0.0.40
codegen_flags: <defaults>
</compile_context>

<pallas_src>
import functools
import math

import jax
import jax.numpy as jnp
from jax import lax
from jax.experimental import pallas as pl
from jax.experimental.pallas import tpu as pltpu


def _round_up(x, m):
    return (x + m - 1) // m * m


def _cdiv(a, b):
    return (a + b - 1) // b


# ----------------------------- Pallas kernel -------------------------------

def _equal_linear_kernel(x_ref, w_ref, b_ref, o_ref, *, scale):
    """One (tm, tn) output tile.  Grid = (M/tm, N/tn, K/tk), K last (reduction).

    x_ref: (tm, tk)  activations (f32 or bf16)
    w_ref: (tn, tk)  weight in native (out_dim, in_dim) layout
    b_ref: (1, tn)   bias
    o_ref: (tm, tn)  f32 output tile; doubles as the accumulator since its
                     index_map ignores k (resident in VMEM across the K axis)
    """
    k = pl.program_id(2)

    # Per-block cast in VMEM (no HBM preprocessing pass); x @ w.T on the MXU.
    part = lax.dot_general(
        x_ref[...].astype(jnp.bfloat16),
        w_ref[...].astype(jnp.bfloat16),
        dimension_numbers=(((1,), (1,)), ((), ())),
        preferred_element_type=jnp.float32,
    )

    @pl.when(k == 0)
    def _():
        o_ref[...] = part

    @pl.when(k > 0)
    def _():
        o_ref[...] += part

    @pl.when(k == pl.num_programs(2) - 1)
    def _():
        # Equal-lr scale applied once, in f32, after accumulation.
        o_ref[...] = o_ref[...] * scale + b_ref[...].astype(jnp.float32)


# ------------------------------ tiling logic --------------------------------

_MAX_TK = 2048  # single-step reduction up to this K


def _pick_tiles(M, N, K):
    tm = min(512, _round_up(M, 8))
    if N < 128:
        tn = N  # full-dim escape for the (8,128) constraint
    else:
        tn = min(512, _round_up(N, 128))
        # v7x megacore: if the M axis has a single block, make sure the N
        # (parallel) axis has >= 2 blocks so both TensorCores get work.
        if _cdiv(M, tm) == 1 and N >= 256:
            tn = min(tn, _round_up(_cdiv(N, 2), 128))
    tk = K if K <= _MAX_TK else 512
    return tm, tn, tk


def _tiled_matmul_bias(x2d, w, bias2d, scale):
    """out[M,N] = (x2d[M,K] @ w[N,K].T) * scale + bias2d[1,N], f32 accumulation."""
    M, K = x2d.shape
    N = w.shape[0]
    tm, tn, tk = _pick_tiles(M, N, K)

    # Only the reduction axis ever needs zero padding, and only if tk does not
    # cover / divide K exactly (rare: K > 2048 and K % 512 != 0).
    Kp = K if tk == K else _round_up(K, tk)
    if Kp != K:
        # TODO(synk): per-call weight pad on this rare path; pre-pad the
        # parameter once outside the hot loop if this shape is common.
        x2d = jnp.pad(x2d, ((0, 0), (0, Kp - K)))
        w = jnp.pad(w, ((0, 0), (0, Kp - K)))

    grid = (_cdiv(M, tm), _cdiv(N, tn), Kp // tk)

    kernel = functools.partial(_equal_linear_kernel, scale=scale)

    return pl.pallas_call(
        kernel,
        out_shape=jax.ShapeDtypeStruct((M, N), jnp.float32),
        grid_spec=pltpu.PrefetchScalarGridSpec(
            num_scalar_prefetch=0,
            grid=grid,
            in_specs=[
                pl.BlockSpec((tm, tk), lambda i, j, k: (i, k)),   # x
                pl.BlockSpec((tn, tk), lambda i, j, k: (j, k)),   # w (native layout)
                pl.BlockSpec((1, tn), lambda i, j, k: (0, j)),    # bias
            ],
            out_specs=pl.BlockSpec((tm, tn), lambda i, j, k: (i, j)),
        ),
        compiler_params=pltpu.CompilerParams(
            dimension_semantics=("parallel", "parallel", "arbitrary"),
            # Max working set ~18 MiB (512x2048 f32 blocks, double-buffered,
            # plus the resident output); 32 MiB leaves Mosaic headroom and
            # stays well under v7x's 64 MiB physical VMEM.
            vmem_limit_bytes=32 * 1024 * 1024,
        ),
    )(x2d, w, bias2d)


# ------------------------------ public API ---------------------------------

def equal_linear(x, weight, bias):
    """EqualLinear.forward: x @ (weight * sqrt(2/in_dim)).T + bias.

    x:      (..., in_dim)
    weight: (out_dim, in_dim) — the *_orig parameter (~N(0,1)).  May be f32 or
            pre-cast once to bf16 (recommended: halves weight HBM traffic);
            it is neither scaled, transposed, nor padded per call.
    bias:   (out_dim,)
    """
    out_dim, in_dim = weight.shape
    lead = x.shape[:-1]
    M = 1
    for d in lead:
        M *= d

    # Equal-lr scaling: fan_in = in_dim (weight[0][0].numel() == 1 for Linear).
    scale = math.sqrt(2.0 / in_dim)

    x2d = x.reshape(M, in_dim)
    b2d = bias.reshape(1, out_dim)
    out = _tiled_matmul_bias(x2d, weight, b2d, scale)
    return out.reshape(*lead, out_dim)


# --------------------------------- test ------------------------------------

if __name__ == "__main__":
    key = jax.random.PRNGKey(0)
    k_x, k_w = jax.random.split(key)

    # small config consistent with the module: batch=2, seq=8, in_dim=32, out_dim=64
    B, S, D_in, D_out = 2, 8, 32, 64
    x = jax.random.normal(k_x, (B, S, D_in), jnp.float32)
    weight = jax.random.normal(k_w, (D_out, D_in), jnp.float32)   # .normal_()
    bias = jnp.zeros((D_out,), jnp.float32)                        # .zero_()

    out = jax.jit(equal_linear)(x, weight, bias)
    out = jax.block_until_ready(out)

    assert out.shape == (B, S, D_out), out.shape
    assert bool(jnp.all(jnp.isfinite(out)))

    # reference (f32) — bf16 MXU operands introduce small, bounded drift
    ref = x @ (weight * math.sqrt(2.0 / D_in)).T + bias
    rel_err = jnp.max(jnp.abs(out - ref)) / (jnp.max(jnp.abs(ref)) + 1e-6)
    assert float(rel_err) < 2e-2, float(rel_err)

    print("KERNEL_OK")
</pallas_src>

<mosaic_0001>
module attributes {stable_mosaic.version = 11 : i64} {
  func.func @_equal_linear_kernel(%arg0: i32, %arg1: i32, %arg2: i32, %arg3: memref<16x32xf32, #tpu.memory_space<vmem>>, %arg4: memref<64x32xf32, #tpu.memory_space<vmem>>, %arg5: memref<1x64xf32, #tpu.memory_space<vmem>>, %arg6: memref<16x64xf32, #tpu.memory_space<vmem>>) attributes {dimension_semantics = [#tpu.dimension_semantics<parallel>, #tpu.dimension_semantics<parallel>, #tpu.dimension_semantics<arbitrary>], iteration_bounds = array<i64: 1, 1, 1>, scalar_prefetch = 0 : i64, scratch_operands = 0 : i64, tpu.core_type = #tpu.core_type<tc>, window_params = [{transform_indices = @transform_0, window_bounds = array<i64: 16, 32>}, {transform_indices = @transform_1, window_bounds = array<i64: 64, 32>}, {transform_indices = @transform_2, window_bounds = array<i64: 1, 64>}, {transform_indices = @transform_3, window_bounds = array<i64: 16, 64>}]} {
    %c0 = arith.constant 0 : index
    %c0_0 = arith.constant 0 : index
    %0 = vector.load %arg3[%c0, %c0_0] : memref<16x32xf32, #tpu.memory_space<vmem>>, vector<16x32xf32>
    %1 = arith.truncf %0 : vector<16x32xf32> to vector<16x32xbf16>
    %c0_1 = arith.constant 0 : index
    %c0_2 = arith.constant 0 : index
    %2 = vector.load %arg4[%c0_1, %c0_2] : memref<64x32xf32, #tpu.memory_space<vmem>>, vector<64x32xf32>
    %3 = arith.truncf %2 : vector<64x32xf32> to vector<64x32xbf16>
    %cst = arith.constant dense<0.000000e+00> : vector<16x64xf32>
    %4 = tpu.matmul %1, %3, %cst {dimension_numbers = #tpu.dot_dimension_numbers<[1], [1], [0], [0], [0, 0, 1, 0], [], []>} : vector<16x32xbf16>, vector<64x32xbf16>, vector<16x64xf32> -> vector<16x64xf32>
    %c0_i32 = arith.constant 0 : i32
    %5 = arith.cmpi eq, %arg2, %c0_i32 : i32
    %6 = arith.extui %5 : i1 to i32
    %c0_i32_3 = arith.constant 0 : i32
    %7 = arith.cmpi ne, %6, %c0_i32_3 : i32
    scf.if %7 {
      %c0_8 = arith.constant 0 : index
      %c0_9 = arith.constant 0 : index
      %14 = vector.load %arg6[%c0_8, %c0_9] : memref<16x64xf32, #tpu.memory_space<vmem>>, vector<16x64xf32>
      tpu.vector_store %arg6[%c0_8, %c0_9], %4 {strides = array<i32>} : memref<16x64xf32, #tpu.memory_space<vmem>>, vector<16x64xf32>,
    } else {
    }
    %c0_i32_4 = arith.constant 0 : i32
    %8 = arith.cmpi sgt, %arg2, %c0_i32_4 : i32
    %9 = arith.extui %8 : i1 to i32
    %c0_i32_5 = arith.constant 0 : i32
    %10 = arith.cmpi ne, %9, %c0_i32_5 : i32
    scf.if %10 {
      %c0_8 = arith.constant 0 : index
      %c0_9 = arith.constant 0 : index
      %14 = vector.load %arg6[%c0_8, %c0_9] : memref<16x64xf32, #tpu.memory_space<vmem>>, vector<16x64xf32>
      %15 = arith.addf %14, %4 : vector<16x64xf32>
      %c0_10 = arith.constant 0 : index
      %c0_11 = arith.constant 0 : index
      %16 = vector.load %arg6[%c0_10, %c0_11] : memref<16x64xf32, #tpu.memory_space<vmem>>, vector<16x64xf32>
      tpu.vector_store %arg6[%c0_10, %c0_11], %15 {strides = array<i32>} : memref<16x64xf32, #tpu.memory_space<vmem>>, vector<16x64xf32>,
    } else {
    }
    %c0_i32_6 = arith.constant 0 : i32
    %11 = arith.cmpi eq, %arg2, %c0_i32_6 : i32
    %12 = arith.extui %11 : i1 to i32
    %c0_i32_7 = arith.constant 0 : i32
    %13 = arith.cmpi ne, %12, %c0_i32_7 : i32
    scf.if %13 {
      %c0_8 = arith.constant 0 : index
      %c0_9 = arith.constant 0 : index
      %14 = vector.load %arg6[%c0_8, %c0_9] : memref<16x64xf32, #tpu.memory_space<vmem>>, vector<16x64xf32>
      %cst_10 = arith.constant 2.500000e-01 : f32
      %15 = vector.broadcast %cst_10 : f32 to vector<16x64xf32>
      %16 = arith.mulf %14, %15 : vector<16x64xf32>
      %c0_11 = arith.constant 0 : index
      %c0_12 = arith.constant 0 : index
      %17 = vector.load %arg5[%c0_11, %c0_12] : memref<1x64xf32, #tpu.memory_space<vmem>>, vector<1x64xf32>
      %18 = vector.broadcast %17 : vector<1x64xf32> to vector<16x64xf32>
      %19 = arith.addf %16, %18 : vector<16x64xf32>
      %c0_13 = arith.constant 0 : index
      %c0_14 = arith.constant 0 : index
      %20 = vector.load %arg6[%c0_13, %c0_14] : memref<16x64xf32, #tpu.memory_space<vmem>>, vector<16x64xf32>
      tpu.vector_store %arg6[%c0_13, %c0_14], %19 {strides = array<i32>} : memref<16x64xf32, #tpu.memory_space<vmem>>, vector<16x64xf32>,
    } else {
    }
    return
  }
  func.func @transform_0(%arg0: i32, %arg1: i32, %arg2: i32) -> (i32, i32) {
    %c0_i32 = arith.constant 0 : i32
    return %arg0, %arg2 : i32, i32
  }
  func.func @transform_1(%arg0: i32, %arg1: i32, %arg2: i32) -> (i32, i32) {
    %c0_i32 = arith.constant 0 : i32
    return %arg1, %arg2 : i32, i32
  }
  func.func @transform_2(%arg0: i32, %arg1: i32, %arg2: i32) -> (i32, i32) {
    %c0_i32 = arith.constant 0 : i32
    %c0_i32_0 = arith.constant 0 : i32
    return %c0_i32, %arg1 : i32, i32
  }
  func.func @transform_3(%arg0: i32, %arg1: i32, %arg2: i32) -> (i32, i32) {
    %c0_i32 = arith.constant 0 : i32
    return %arg0, %arg1 : i32, i32
  }
}

</mosaic_0001>

<llo_original>
// kernel: equal_linear.1
$region0: #{equal_linear.1}
  #allocation0 [shape = 'u32[]', space=smem, size = 0x4, offset = 0x4, fixed_abs, tag = 'smem constant byte address 0x4 - core index']
  #allocation1 [shape = 'u32[72,128]{1,0:T(1,128)}', space=vmem, size = 0x9000, scoped, tag = 'internal scratch']
  %s0 = inlined_call_operand.vmem [shape: f32[16,32], index: 0, kind: input, shape index: {}]
  %s1 = inlined_call_operand.vmem [shape: f32[64,32], index: 1, kind: input, shape index: {}]
  %s2 = inlined_call_operand.vmem [shape: f32[1,64], index: 2, kind: input, shape index: {}]
  %s3 = inlined_call_operand.hbm [shape: f32[16,64], index: 3, kind: output, shape index: {}]
  %s4 = sld [smem:[#allocation0]]
  $region34: #{equal_linear.1} parent=0
    _
  %s6 = ssub.s32 1, %s4
  %s7 = scalar_select 0, %s6, %s4
  $region1: #{equal_linear.1} parent=0
    #allocation2 [shape = 'u8[8192]{0}', space=vmem, size = 0x2000, scoped, tag = 'output window, operand 0, single buffered']
    #allocation3 [shape = 's32[1]{0}', space=sflag, size = 0x4, scoped, tag = 'scoped memory for equal_linear.1']
    %8 = vsyncpa [#allocation3], 0
    // Predicated region
    $region2: #{equal_linear.1} parent=1 // pred_check
      _
    $region3: #{equal_linear.1} parent=1 // pred_check_branch
      %10 = sbr.rel (0) target = $region5
    $region4: #{equal_linear.1} parent=1 // pred_region
      _
    $region5: #{equal_linear.1} parent=1 // pred_fallthru
      _
    // Predicated region
    $region6: #{equal_linear.1} parent=1 // pred_check
      _
    $region7: #{equal_linear.1} parent=1 // pred_check_branch
      %12 = sbr.rel (0) target = $region9
    $region8: #{equal_linear.1} parent=1 // pred_region
      _
    $region9: #{equal_linear.1} parent=1 // pred_fallthru
      _
    // Predicated region
    $region10: #{equal_linear.1} parent=1 // pred_check
      _
    $region11: #{equal_linear.1} parent=1 // pred_check_branch
      %14 = sbr.rel (0) target = $region13
    $region12: #{equal_linear.1} parent=1 // pred_region
      _
    $region13: #{equal_linear.1} parent=1 // pred_fallthru
      _
    %v16 = vld [vmem:[%s0] sm:$0xff]
    %v17 = vld [vmem:[%s0 + $0x8] sm:$0xff]
    %v18 = vpack.c.bf16 %v17, %v16
    %v19 = vld [vmem:[%s1] sm:$0xff]
    %v20 = vld [vmem:[%s1 + $0x8] sm:$0xff]
    %v21 = vld [vmem:[%s1 + $0x10] sm:$0xff]
    %v22 = vld [vmem:[%s1 + $0x18] sm:$0xff]
    %v23 = vld [vmem:[%s1 + $0x20] sm:$0xff]
    %v24 = vld [vmem:[%s1 + $0x28] sm:$0xff]
    %v25 = vld [vmem:[%s1 + $0x30] sm:$0xff]
    %v26 = vld [vmem:[%s1 + $0x38] sm:$0xff]
    %v27 = vpack.c.bf16 %v20, %v19
    %v28 = vpack.c.bf16 %v22, %v21
    %v29 = vpack.c.bf16 %v24, %v23
    %v30 = vpack.c.bf16 %v26, %v25
    %vm31 = vcmask 261120
    %v33 = vsel %vm31, %v18, 0
    %v36 = vsel %vm31, %v27, 0
    %v39 = vsel %vm31, %v28, 0
    %v42 = vsel %vm31, %v29, 0
    %v45 = vsel %vm31, %v30, 0
    %47 = vmatpush.bf16.xpose.msra.mxu0 0
    %48 = vmatpush.bf16.xpose.msra.mxu0 0
    %49 = vmatpush.bf16.xpose.msra.mxu0 0
    %50 = vmatpush.bf16.xpose.msra.mxu0 0
    %51 = vmatpush.bf16.xpose.msra.mxu0 %v45
    %52 = vmatpush.bf16.xpose.msra.mxu0 %v42
    %53 = vmatpush.bf16.xpose.msra.mxu0 %v39
    %54 = vmatpush.bf16.xpose.msra.mxu0 %v36
    %55 = vmatmul.bf16.gmra.mxu0 %v33
    %v56 = vpop.f32.mrf.mxu0
    %v57 = vadd.f32 0.0, %v56
    %v58 = vpop.f32.mrf.mxu0
    %v59 = vadd.f32 0.0, %v58
    %60 = vdwg.mxu0
    %p61 = scmp.eq.s32.totalorder 0, 0
    // Predicated region
    $region14: #{equal_linear.1} parent=1 // pred_check
      %p62 = pneg %p61
    $region15: #{equal_linear.1} parent=1 // pred_check_branch
      %64 = sbr.rel (%p62) target = $region17
    $region16: #{equal_linear.1} parent=1 // pred_region
      %vm65 = vcmask 523264
      %66 = vst.msk [vmem:[#allocation2] sm:$0xff] %vm65, %v57
      %67 = vst.msk [vmem:[#allocation2 + $0x8] sm:$0xff] %vm65, %v59
    $region17: #{equal_linear.1} parent=1 // pred_fallthru
      _
    %p68 = scmp.gt.s32.totalorder 0, 0
    // Predicated region
    $region18: #{equal_linear.1} parent=1 // pred_check
      %p69 = pneg %p68
    $region19: #{equal_linear.1} parent=1 // pred_check_branch
      %71 = sbr.rel (%p69) target = $region21
    $region20: #{equal_linear.1} parent=1 // pred_region
      %v72 = vld [vmem:[#allocation2] sm:$0xff]
      %v73 = vld [vmem:[#allocation2 + $0x8] sm:$0xff]
      %v74 = vadd.f32 %v72, %v57
      %v75 = vadd.f32 %v73, %v59
      %vm76 = vcmask 523264
      %77 = vst.msk [vmem:[#allocation2] sm:$0xff] %vm76, %v74
      %78 = vst.msk [vmem:[#allocation2 + $0x8] sm:$0xff] %vm76, %v75
    $region21: #{equal_linear.1} parent=1 // pred_fallthru
      _
    // Predicated region
    $region22: #{equal_linear.1} parent=1 // pred_check
      %p79 = pneg %p61
    $region23: #{equal_linear.1} parent=1 // pred_check_branch
      %81 = sbr.rel (%p79) target = $region25
    $region24: #{equal_linear.1} parent=1 // pred_region
      %v82 = vld [vmem:[#allocation2] sm:$0xff]
      %v83 = vld [vmem:[#allocation2 + $0x8] sm:$0xff]
      %v84 = vmul.f32 %v82, 0.25
      %v85 = vmul.f32 %v83, 0.25
      %v86 = vld [vmem:[%s2] sm:$0x1]
      %v88 = vperm.slane %v86, 0
      %v90 = vadd.f32 %v84, %v88
      %v91 = vadd.f32 %v85, %v88
      %vm92 = vcmask 523264
      %93 = vst.msk [vmem:[#allocation2] sm:$0xff] %vm92, %v90
      %94 = vst.msk [vmem:[#allocation2 + $0x8] sm:$0xff] %vm92, %v91
    $region25: #{equal_linear.1} parent=1 // pred_fallthru
      _
    // Predicated region
    $region26: #{equal_linear.1} parent=1 // pred_check
      _
    $region27: #{equal_linear.1} parent=1 // pred_check_branch
      %96 = sbr.rel (0) target = $region29
    $region28: #{equal_linear.1} parent=1 // pred_region
      %98 = vsyncadd [#allocation3], 0
      %s99 = sshll.u32 [#allocation2], 4
      %s100 = int_to_ptr.vmem [resolvable:$true] %s99
      %s101 = sshll.u32 %s3, 4
      %s102 = int_to_ptr.hbm [resolvable:$true] %s101
      %107 = dma.vmem_to_hbm [thread:$0]  %s100, 256, %s102, [#allocation3], 128, 128, 8
    $region29: #{equal_linear.1} parent=1 // pred_fallthru
      _
    // Predicated region
    $region30: #{equal_linear.1} parent=1 // pred_check
      _
    $region31: #{equal_linear.1} parent=1 // pred_check_branch
      %109 = sbr.rel (0) target = $region33
    $region32: #{equal_linear.1} parent=1 // pred_region
      %111 = dma.done [#allocation3], 256
    $region33: #{equal_linear.1} parent=1 // pred_fallthru
      _
    %112 = vsyncpa [#allocation3], 1

</llo_original>
